<compile_context>
chip_gen: v7x
topology: tpu7x:2x2x1
jax: 0.10.0
libtpu: 0.0.40
codegen_flags: <defaults>
</compile_context>

<pallas_src>
import functools

import jax
import jax.numpy as jnp
from jax.experimental import pallas as pl
from jax.experimental.pallas import tpu as pltpu


def _round_up(x, m):
    return ((x + m - 1) // m) * m


# ---------------------------------------------------------------------------
# Fused kernel: patch-embed matmul -> token mean-pool -> pooler -> classifier
# ---------------------------------------------------------------------------
def _fused_forward_kernel(
    patches_ref,   # [1, tn, Kp]  bf16  token tile of flattened patches (streamed)
    w_patch_ref,   # [Kp, Hp]     bf16  patch-embed weight        (VMEM resident)
    b_patch_ref,   # [1, Hp]      f32
    w_pool_ref,    # [Hp, Hp]     bf16  pooler dense weight       (VMEM resident)
    b_pool_ref,    # [1, Hp]      f32
    w_cls_ref,     # [Hp, Cp]     bf16  classifier weight         (VMEM resident)
    b_cls_ref,     # [1, Cp]      f32
    out_ref,       # [1, 1, Cp]   f32   logits for this batch row
    acc_ref,       # [1, Hp]      f32   running sum of token embeddings
    *,
    inv_n_tokens,
):
    t = pl.program_id(1)

    @pl.when(t == 0)
    def _init():
        acc_ref[...] = jnp.zeros_like(acc_ref)

    # Patch-embed matmul for this token tile (MXU, bf16 operands, f32 acc),
    # immediately reduced over tokens into the resident pooled-sum scratch,
    # so the per-tile [tn, Hp] embedding never leaves vregs/VMEM.
    x = patches_ref[0]                                                    # [tn, Kp]
    emb = jnp.dot(x, w_patch_ref[...], preferred_element_type=jnp.float32)
    acc_ref[...] += jnp.sum(emb, axis=0, keepdims=True)                   # [1, Hp]

    @pl.when(t == pl.num_programs(1) - 1)
    def _finalize():
        # Mean over the real token count; patch-embed bias hoisted to here
        # (mean(xW + b) == mean(xW) + b).  Padded token rows are zero, so they
        # contribute nothing to the accumulated sum.
        pooled = acc_ref[...] * inv_n_tokens + b_patch_ref[...]           # [1, Hp] f32
        # Pooler dense + tanh (stand-in for Dinov2 pooler_output).
        # TODO(synk): real rad-dino pooler uses the CLS token through dense+tanh;
        # the injected transformer encoder is not reproduced here.
        p = jnp.tanh(
            jnp.dot(pooled.astype(jnp.bfloat16), w_pool_ref[...],
                    preferred_element_type=jnp.float32)
            + b_pool_ref[...]
        )
        # Classifier: nn.Linear(hidden_size, num_classes) from the module.
        logits = (
            jnp.dot(p.astype(jnp.bfloat16), w_cls_ref[...],
                    preferred_element_type=jnp.float32)
            + b_cls_ref[...]
        )                                                                 # [1, Cp]
        out_ref[0] = logits


# ---------------------------------------------------------------------------
# Wrapper
# ---------------------------------------------------------------------------
def rad_dino_classifier_forward(pixel_values, params, patch_size, *, token_tile=512):
    """pixel_values: [B, C, H, W] float32 (NCHW). Returns logits [B, num_classes]."""
    B, C, H, W = pixel_values.shape
    P = patch_size
    nh, nw = H // P, W // P
    n_tokens = nh * nw
    K = C * P * P
    Hd = params["w_patch"].shape[1]
    n_cls = params["w_cls"].shape[1]

    # Lane / MXU aligned padded sizes.
    Kp = _round_up(K, 128)
    Hp = _round_up(Hd, 128)
    Cp = _round_up(n_cls, 128)
    tn = min(_round_up(n_tokens, 8), token_tile)      # token tile (sublane aligned)
    Np = _round_up(n_tokens, tn)

    # ---- glue: patch extraction (pure reshape/transpose, no compute) ----
    patches = (
        pixel_values.reshape(B, C, nh, P, nw, P)
        .transpose(0, 2, 4, 1, 3, 5)
        .reshape(B, n_tokens, K)
    )
    # Zero-pad tokens and contraction dim; zero rows/cols contribute nothing.
    patches = jnp.pad(patches, ((0, 0), (0, Np - n_tokens), (0, Kp - K)))
    patches = patches.astype(jnp.bfloat16)

    # ---- weight prep: pad to aligned shapes; matmul operands in bf16 ----
    w_patch = jnp.pad(params["w_patch"], ((0, Kp - K), (0, Hp - Hd))).astype(jnp.bfloat16)
    b_patch = jnp.pad(params["b_patch"], ((0, 0), (0, Hp - Hd)))
    w_pool = jnp.pad(params["w_pool"], ((0, Hp - Hd), (0, Hp - Hd))).astype(jnp.bfloat16)
    b_pool = jnp.pad(params["b_pool"], ((0, 0), (0, Hp - Hd)))
    w_cls = jnp.pad(params["w_cls"], ((0, Hp - Hd), (0, Cp - n_cls))).astype(jnp.bfloat16)
    b_cls = jnp.pad(params["b_cls"], ((0, 0), (0, Cp - n_cls)))

    grid = (B, Np // tn)   # batch outer (parallel), token reduction inner (arbitrary)
    kernel = functools.partial(_fused_forward_kernel, inv_n_tokens=1.0 / n_tokens)

    logits_padded = pl.pallas_call(
        kernel,
        out_shape=jax.ShapeDtypeStruct((B, 1, Cp), jnp.float32),
        grid=grid,
        in_specs=[
            pl.BlockSpec((1, tn, Kp), lambda b, t: (b, t, 0)),   # patches: streamed tiles
            pl.BlockSpec((Kp, Hp), lambda b, t: (0, 0)),         # weights: DMA'd once,
            pl.BlockSpec((1, Hp), lambda b, t: (0, 0)),          # constant index_maps
            pl.BlockSpec((Hp, Hp), lambda b, t: (0, 0)),
            pl.BlockSpec((1, Hp), lambda b, t: (0, 0)),
            pl.BlockSpec((Hp, Cp), lambda b, t: (0, 0)),
            pl.BlockSpec((1, Cp), lambda b, t: (0, 0)),
        ],
        out_specs=pl.BlockSpec((1, 1, Cp), lambda b, t: (b, 0, 0)),
        scratch_shapes=[pltpu.VMEM((1, Hp), jnp.float32)],       # pooled-sum accumulator
        compiler_params=pltpu.CompilerParams(
            dimension_semantics=("parallel", "arbitrary"),
        ),
    )(patches, w_patch, b_patch, w_pool, b_pool, w_cls, b_cls)

    return logits_padded[:, 0, :n_cls]


# ---------------------------------------------------------------------------
# Pure-JAX reference (for correctness check of the fused kernel)
# ---------------------------------------------------------------------------
def _reference_forward(pixel_values, params, patch_size):
    B, C, H, W = pixel_values.shape
    P = patch_size
    nh, nw = H // P, W // P
    patches = (
        pixel_values.reshape(B, C, nh, P, nw, P)
        .transpose(0, 2, 4, 1, 3, 5)
        .reshape(B, nh * nw, C * P * P)
    )
    emb = patches @ params["w_patch"] + params["b_patch"]
    pooled = emb.mean(axis=1)
    p = jnp.tanh(pooled @ params["w_pool"] + params["b_pool"])
    return p @ params["w_cls"] + params["b_cls"]


# ---------------------------------------------------------------------------
# Deterministic parameter init + demo
# ---------------------------------------------------------------------------
def make_params(key, in_ch, patch_size, hidden, num_classes):
    k1, k2, k3, k4, k5, k6 = jax.random.split(key, 6)
    kdim = in_ch * patch_size * patch_size
    return {
        "w_patch": jax.random.normal(k1, (kdim, hidden), jnp.float32) * 0.02,
        "b_patch": jax.random.normal(k4, (1, hidden), jnp.float32) * 0.02,
        "w_pool": jax.random.normal(k2, (hidden, hidden), jnp.float32) * 0.02,
        "b_pool": jax.random.normal(k5, (1, hidden), jnp.float32) * 0.02,
        # nn.Linear(hidden_size, num_classes) — the classifier defined in __init__
        "w_cls": jax.random.normal(k3, (hidden, num_classes), jnp.float32) * 0.02,
        "b_cls": jax.random.normal(k6, (1, num_classes), jnp.float32) * 0.02,
    }


if __name__ == "__main__":
    B, C, HW = 2, 3, 16          # NCHW pixel_values, small synthetic shapes
    PATCH = 4                    # 16/4 -> 4x4 = 16 patches
    HIDDEN = 32                  # backbone.config.hidden_size stand-in
    NUM_CLASSES = 8

    key = jax.random.PRNGKey(0)
    k_x, k_p = jax.random.split(key)
    pixel_values = jax.random.normal(k_x, (B, C, HW, HW), jnp.float32)
    params = make_params(k_p, C, PATCH, HIDDEN, NUM_CLASSES)

    logits = rad_dino_classifier_forward(pixel_values, params, PATCH)
    logits = jax.block_until_ready(logits)

    assert logits.shape == (B, NUM_CLASSES)
    assert bool(jnp.all(jnp.isfinite(logits)))

    ref = _reference_forward(pixel_values, params, PATCH)
    assert bool(jnp.allclose(logits, ref, rtol=2e-2, atol=2e-2)), (
        float(jnp.max(jnp.abs(logits - ref)))
    )
    print("KERNEL_OK")
</pallas_src>

<mosaic_0001>
module attributes {stable_mosaic.version = 11 : i64} {
  func.func @_fused_forward_kernel(%arg0: i32, %arg1: i32, %arg2: memref<1x16x128xbf16, #tpu.memory_space<vmem>>, %arg3: memref<128x128xbf16, #tpu.memory_space<vmem>>, %arg4: memref<1x128xf32, #tpu.memory_space<vmem>>, %arg5: memref<128x128xbf16, #tpu.memory_space<vmem>>, %arg6: memref<1x128xf32, #tpu.memory_space<vmem>>, %arg7: memref<128x128xbf16, #tpu.memory_space<vmem>>, %arg8: memref<1x128xf32, #tpu.memory_space<vmem>>, %arg9: memref<1x1x128xf32, #tpu.memory_space<vmem>>, %arg10: memref<1x128xf32, #tpu.memory_space<vmem>>) attributes {dimension_semantics = [#tpu.dimension_semantics<parallel>, #tpu.dimension_semantics<arbitrary>], iteration_bounds = array<i64: 2, 1>, scalar_prefetch = 0 : i64, scratch_operands = 1 : i64, tpu.core_type = #tpu.core_type<tc>, window_params = [{transform_indices = @transform_0, window_bounds = array<i64: 1, 16, 128>}, {pipeline_mode = #tpu.pipeline_mode<synchronous>, transform_indices = @transform_1, window_bounds = array<i64: 128, 128>}, {pipeline_mode = #tpu.pipeline_mode<synchronous>, transform_indices = @transform_2, window_bounds = array<i64: 1, 128>}, {pipeline_mode = #tpu.pipeline_mode<synchronous>, transform_indices = @transform_3, window_bounds = array<i64: 128, 128>}, {pipeline_mode = #tpu.pipeline_mode<synchronous>, transform_indices = @transform_4, window_bounds = array<i64: 1, 128>}, {pipeline_mode = #tpu.pipeline_mode<synchronous>, transform_indices = @transform_5, window_bounds = array<i64: 128, 128>}, {pipeline_mode = #tpu.pipeline_mode<synchronous>, transform_indices = @transform_6, window_bounds = array<i64: 1, 128>}, {transform_indices = @transform_7, window_bounds = array<i64: 1, 1, 128>}]} {
    %c0_i32 = arith.constant 0 : i32
    %0 = arith.cmpi eq, %arg1, %c0_i32 : i32
    %1 = arith.extui %0 : i1 to i32
    %c0_i32_0 = arith.constant 0 : i32
    %2 = arith.cmpi ne, %1, %c0_i32_0 : i32
    scf.if %2 {
      %cst_12 = arith.constant 0.000000e+00 : f32
      %15 = vector.broadcast %cst_12 : f32 to vector<1x128xf32>
      %c0_13 = arith.constant 0 : index
      %c0_14 = arith.constant 0 : index
      %16 = vector.load %arg10[%c0_13, %c0_14] : memref<1x128xf32, #tpu.memory_space<vmem>>, vector<1x128xf32>
      tpu.vector_store %arg10[%c0_13, %c0_14], %15 {strides = array<i32>} : memref<1x128xf32, #tpu.memory_space<vmem>>, vector<1x128xf32>,
    } else {
    }
    %c0 = arith.constant 0 : index
    %c0_1 = arith.constant 0 : index
    %c0_2 = arith.constant 0 : index
    %3 = vector.load %arg2[%c0, %c0_1, %c0_2] : memref<1x16x128xbf16, #tpu.memory_space<vmem>>, vector<1x16x128xbf16>
    %4 = vector.shape_cast %3 : vector<1x16x128xbf16> to vector<16x128xbf16>
    %c0_3 = arith.constant 0 : index
    %c0_4 = arith.constant 0 : index
    %5 = vector.load %arg3[%c0_3, %c0_4] : memref<128x128xbf16, #tpu.memory_space<vmem>>, vector<128x128xbf16>
    %cst = arith.constant dense<0.000000e+00> : vector<16x128xf32>
    %6 = tpu.matmul %4, %5, %cst {dimension_numbers = #tpu.dot_dimension_numbers<[1], [0], [0], [1], [0, 0, 1, 1], [], []>} : vector<16x128xbf16>, vector<128x128xbf16>, vector<16x128xf32> -> vector<16x128xf32>
    %c0_5 = arith.constant 0 : index
    %c0_6 = arith.constant 0 : index
    %7 = vector.load %arg10[%c0_5, %c0_6] : memref<1x128xf32, #tpu.memory_space<vmem>>, vector<1x128xf32>
    %cst_7 = arith.constant dense<0.000000e+00> : vector<128xf32>
    %8 = vector.multi_reduction <add>, %6, %cst_7 [0] : vector<16x128xf32> to vector<128xf32>
    %9 = vector.shape_cast %8 : vector<128xf32> to vector<1x128xf32>
    %10 = arith.addf %7, %9 : vector<1x128xf32>
    %c0_8 = arith.constant 0 : index
    %c0_9 = arith.constant 0 : index
    %11 = vector.load %arg10[%c0_8, %c0_9] : memref<1x128xf32, #tpu.memory_space<vmem>>, vector<1x128xf32>
    tpu.vector_store %arg10[%c0_8, %c0_9], %10 {strides = array<i32>} : memref<1x128xf32, #tpu.memory_space<vmem>>, vector<1x128xf32>,
    %c0_i32_10 = arith.constant 0 : i32
    %12 = arith.cmpi eq, %arg1, %c0_i32_10 : i32
    %13 = arith.extui %12 : i1 to i32
    %c0_i32_11 = arith.constant 0 : i32
    %14 = arith.cmpi ne, %13, %c0_i32_11 : i32
    scf.if %14 {
      %c0_12 = arith.constant 0 : index
      %c0_13 = arith.constant 0 : index
      %15 = vector.load %arg10[%c0_12, %c0_13] : memref<1x128xf32, #tpu.memory_space<vmem>>, vector<1x128xf32>
      %cst_14 = arith.constant 6.250000e-02 : f32
      %16 = vector.broadcast %cst_14 : f32 to vector<1x128xf32>
      %17 = arith.mulf %15, %16 : vector<1x128xf32>
      %c0_15 = arith.constant 0 : index
      %c0_16 = arith.constant 0 : index
      %18 = vector.load %arg4[%c0_15, %c0_16] : memref<1x128xf32, #tpu.memory_space<vmem>>, vector<1x128xf32>
      %19 = arith.addf %17, %18 : vector<1x128xf32>
      %20 = arith.truncf %19 : vector<1x128xf32> to vector<1x128xbf16>
      %c0_17 = arith.constant 0 : index
      %c0_18 = arith.constant 0 : index
      %21 = vector.load %arg5[%c0_17, %c0_18] : memref<128x128xbf16, #tpu.memory_space<vmem>>, vector<128x128xbf16>
      %cst_19 = arith.constant dense<0.000000e+00> : vector<1x128xf32>
      %22 = tpu.matmul %20, %21, %cst_19 {dimension_numbers = #tpu.dot_dimension_numbers<[1], [0], [0], [1], [0, 0, 1, 1], [], []>} : vector<1x128xbf16>, vector<128x128xbf16>, vector<1x128xf32> -> vector<1x128xf32>
      %c0_20 = arith.constant 0 : index
      %c0_21 = arith.constant 0 : index
      %23 = vector.load %arg6[%c0_20, %c0_21] : memref<1x128xf32, #tpu.memory_space<vmem>>, vector<1x128xf32>
      %24 = arith.addf %22, %23 : vector<1x128xf32>
      %25 = math.tanh %24 : vector<1x128xf32>
      %26 = arith.truncf %25 : vector<1x128xf32> to vector<1x128xbf16>
      %c0_22 = arith.constant 0 : index
      %c0_23 = arith.constant 0 : index
      %27 = vector.load %arg7[%c0_22, %c0_23] : memref<128x128xbf16, #tpu.memory_space<vmem>>, vector<128x128xbf16>
      %cst_24 = arith.constant dense<0.000000e+00> : vector<1x128xf32>
      %28 = tpu.matmul %26, %27, %cst_24 {dimension_numbers = #tpu.dot_dimension_numbers<[1], [0], [0], [1], [0, 0, 1, 1], [], []>} : vector<1x128xbf16>, vector<128x128xbf16>, vector<1x128xf32> -> vector<1x128xf32>
      %c0_25 = arith.constant 0 : index
      %c0_26 = arith.constant 0 : index
      %29 = vector.load %arg8[%c0_25, %c0_26] : memref<1x128xf32, #tpu.memory_space<vmem>>, vector<1x128xf32>
      %30 = arith.addf %28, %29 : vector<1x128xf32>
      %c0_27 = arith.constant 0 : index
      %c0_28 = arith.constant 0 : index
      %c0_29 = arith.constant 0 : index
      %31 = vector.load %arg9[%c0_27, %c0_28, %c0_29] : memref<1x1x128xf32, #tpu.memory_space<vmem>>, vector<1x1x128xf32>
      %32 = vector.shape_cast %31 : vector<1x1x128xf32> to vector<1x128xf32>
      %33 = vector.shape_cast %30 : vector<1x128xf32> to vector<1x1x128xf32>
      tpu.vector_store %arg9[%c0_27, %c0_28, %c0_29], %33 {strides = array<i32>} : memref<1x1x128xf32, #tpu.memory_space<vmem>>, vector<1x1x128xf32>,
    } else {
    }
    return
  }
  func.func @transform_0(%arg0: i32, %arg1: i32) -> (i32, i32, i32) {
    %c0_i32 = arith.constant 0 : i32
    %c0_i32_0 = arith.constant 0 : i32
    return %arg0, %arg1, %c0_i32 : i32, i32, i32
  }
  func.func @transform_1(%arg0: i32, %arg1: i32) -> (i32, i32) {
    %c0_i32 = arith.constant 0 : i32
    %c0_i32_0 = arith.constant 0 : i32
    %c0_i32_1 = arith.constant 0 : i32
    return %c0_i32, %c0_i32_0 : i32, i32
  }
  func.func @transform_2(%arg0: i32, %arg1: i32) -> (i32, i32) {
    %c0_i32 = arith.constant 0 : i32
    %c0_i32_0 = arith.constant 0 : i32
    %c0_i32_1 = arith.constant 0 : i32
    return %c0_i32, %c0_i32_0 : i32, i32
  }
  func.func @transform_3(%arg0: i32, %arg1: i32) -> (i32, i32) {
    %c0_i32 = arith.constant 0 : i32
    %c0_i32_0 = arith.constant 0 : i32
    %c0_i32_1 = arith.constant 0 : i32
    return %c0_i32, %c0_i32_0 : i32, i32
  }
  func.func @transform_4(%arg0: i32, %arg1: i32) -> (i32, i32) {
    %c0_i32 = arith.constant 0 : i32
    %c0_i32_0 = arith.constant 0 : i32
    %c0_i32_1 = arith.constant 0 : i32
    return %c0_i32, %c0_i32_0 : i32, i32
  }
  func.func @transform_5(%arg0: i32, %arg1: i32) -> (i32, i32) {
    %c0_i32 = arith.constant 0 : i32
    %c0_i32_0 = arith.constant 0 : i32
    %c0_i32_1 = arith.constant 0 : i32
    return %c0_i32, %c0_i32_0 : i32, i32
  }
  func.func @transform_6(%arg0: i32, %arg1: i32) -> (i32, i32) {
    %c0_i32 = arith.constant 0 : i32
    %c0_i32_0 = arith.constant 0 : i32
    %c0_i32_1 = arith.constant 0 : i32
    return %c0_i32, %c0_i32_0 : i32, i32
  }
  func.func @transform_7(%arg0: i32, %arg1: i32) -> (i32, i32, i32) {
    %c0_i32 = arith.constant 0 : i32
    %c0_i32_0 = arith.constant 0 : i32
    %c0_i32_1 = arith.constant 0 : i32
    return %arg0, %c0_i32, %c0_i32_0 : i32, i32, i32
  }
}

</mosaic_0001>

<llo_original>
// kernel: tpu_custom_call.1
$region0: #{tpu_custom_call.1}
  #allocation0 [shape = 'u32[]', space=smem, size = 0x4, offset = 0x4, fixed_abs, tag = 'smem constant byte address 0x4 - core index']
  #allocation1 [shape = 'u32[144,128]{1,0:T(1,128)}', space=vmem, size = 0x12000, scoped, tag = 'internal scratch']
  #allocation2 [shape = 'f32[1,128]{1,0:T(1,128)}', space=vmem, size = 0x200, scoped, tag = 'scratch operand']
  %s0 = inlined_call_operand.hbm [shape: bf16[2,16,128], index: 0, kind: input, shape index: {}]
  %s1 = inlined_call_operand.hbm [shape: bf16[128,128], index: 1, kind: input, shape index: {}]
  %s2 = inlined_call_operand.vmem [shape: f32[1,128], index: 2, kind: input, shape index: {}]
  %s3 = inlined_call_operand.hbm [shape: bf16[128,128], index: 3, kind: input, shape index: {}]
  %s4 = inlined_call_operand.vmem [shape: f32[1,128], index: 4, kind: input, shape index: {}]
  %s5 = inlined_call_operand.hbm [shape: bf16[128,128], index: 5, kind: input, shape index: {}]
  %s6 = inlined_call_operand.vmem [shape: f32[1,128], index: 6, kind: input, shape index: {}]
  %s7 = inlined_call_operand.hbm [shape: f32[2,1,128], index: 7, kind: output, shape index: {}]
  %s8 = sld [smem:[#allocation0]]
  $region85: #{tpu_custom_call.1} parent=0
    _
  %s10 = ssub.s32 1, %s8
  %s11 = scalar_select 0, %s10, %s8
  $region1: #{tpu_custom_call.1} parent=0
    #allocation3 [shape = 'u8[8192]{0}', space=vmem, size = 0x2000, scoped, tag = 'input window, operand 0']
    #allocation4 [shape = 's32[2]{0}', space=sflag, size = 0x8, scoped, tag = 'scoped memory for tpu_custom_call.1']
    #allocation5 [shape = 's32[2]{0}', space=sflag, size = 0x8, scoped, tag = 'scoped memory for tpu_custom_call.1']
    #allocation6 [shape = 'u8[32768]{0}', space=vmem, size = 0x8000, scoped, tag = 'input window, operand 1, single buffered']
    #allocation7 [shape = 's32[1]{0}', space=sflag, size = 0x4, scoped, tag = 'scoped memory for tpu_custom_call.1']
    #allocation8 [shape = 'u8[32768]{0}', space=vmem, size = 0x8000, scoped, tag = 'input window, operand 3, single buffered']
    #allocation9 [shape = 'u8[32768]{0}', space=vmem, size = 0x8000, scoped, tag = 'input window, operand 5, single buffered']
    #allocation10 [shape = 's32[1]{0}', space=sflag, size = 0x4, scoped, tag = 'scoped memory for tpu_custom_call.1']
    #allocation11 [shape = 'u8[1024]{0}', space=vmem, size = 0x400, scoped, tag = 'output window, operand 0']
    %12 = vsyncpa [#allocation4], 0
    %s13 = scalar_lea.sflag [#allocation4], 1
    %14 = vsyncpa %s13, 0
    %15 = vsyncpa [#allocation7], 0
    %16 = vsyncpa [#allocation10], 0
    %17 = vsyncpa [#allocation5], 0
    %s18 = scalar_lea.sflag [#allocation5], 1
    %19 = vsyncpa %s18, 0
    loop: start=0, step=1, limit=4
    $region2: #{tpu_custom_call.1} parent=1 // loop_pre_header
      _
    $region3: #{tpu_custom_call.1} parent=1 // loop_header
      %s21 = sphi 0, %s25
      %p22 = scmp.ge.s32.totalorder %s21, 4
      %s28 = sphi 0, %s40
      %s29 = sphi 0, %s36
      %s30 = sphi 0, %s28
      %s31 = sphi 0, %s29
      %s32 = sphi 0, %s30
      %s33 = sphi 0, %s31
      %s45 = sphi 0, %s47
      %s48 = sphi 0, %s45
      %s49 = sphi 0, %s48
      %s65 = sphi 0, %s49
      %s69 = sphi 0, %s69
      %s71 = sphi 0, %s69
      %s72 = sphi 0, %s71
      %s86 = sphi 0, %s72
      %s90 = sphi 0, %s90
      %s92 = sphi 0, %s90
      %s93 = sphi 0, %s92
      %s107 = sphi 0, %s93
      %s111 = sphi 0, %s111
      %s113 = sphi 0, %s111
      %s114 = sphi 0, %s113
      %s128 = sphi 0, %s114
      %s132 = sphi 0, %s132
      %s134 = sphi 0, %s132
      %s135 = sphi 0, %s134
      %s149 = sphi 0, %s135
      %s153 = sphi 0, %s153
      %s155 = sphi 0, %s153
      %s156 = sphi 0, %s155
      %s170 = sphi 0, %s156
      %s174 = sphi 0, %s174
      %s176 = sphi 0, %s174
      %s177 = sphi 0, %s176
      %s191 = sphi 0, %s177
      %s197 = sphi 0, %s199
      %s200 = sphi 0, %s197
      %s201 = sphi 0, %s200
      %s217 = sphi 0, %s201
    $region4: #{tpu_custom_call.1} parent=1 // loop_header_branch
      %24 = sbr.rel (%p22) target = $region8
    $region5: #{tpu_custom_call.1} parent=1 // loop_body
      %s26 = ssub.s32 %s21, 1
      %s27 = ssub.s32 %s21, 2
      %s34 = sadd.s32 1, %s29
      %p35 = scmp.ge.s32.totalorder %s34, 1
      %s36 = scalar_select %p35, 0, %s34
      %s37 = sadd.s32 1, %s28
      %s38 = scalar_select %p35, %s37, %s28
      %p39 = scmp.ge.s32.totalorder %s38, 2
      %s40 = scalar_select %p39, 0, %s38
      %s41 = ssub.s32 %s28, %s40
      %s42 = ssub.s32 %s29, %s36
      %s43 = sor.u32 %s41, %s42
      %p44 = scmp.eq.s32.totalorder %s43, 0
      %s46 = sadd.s32 %s45, 1
      %s47 = scalar_select %p44, %s45, %s46
      %p50 = pneg %p44
      %p51 = scmp.eq.s32.totalorder %s21, 1
      %p52 = por %p50, %p51
      %p53 = scmp.ne.s32.totalorder %s45, %s48
      %p54 = scmp.eq.s32.totalorder %s21, 0
      %p55 = por %p53, %p54
      %p56 = scmp.ne.s32.totalorder %s45, %s48
      %p57 = scmp.eq.s32.totalorder %s26, 1
      %p58 = por %p56, %p57
      %p59 = scmp.ne.s32.totalorder %s48, %s49
      %p60 = scmp.eq.s32.totalorder %s26, 0
      %p61 = por %p59, %p60
      %p62 = scmp.ne.s32.totalorder %s48, %s49
      %p63 = scmp.eq.s32.totalorder %s27, 1
      %p64 = por %p62, %p63
      %p66 = scmp.ne.s32.totalorder %s49, %s65
      %p67 = scmp.eq.s32.totalorder %s27, 0
      %p68 = por %p66, %p67
      %s70 = sadd.s32 %s69, 1
      %p73 = scmp.eq.s32.totalorder %s21, 1
      %p74 = scmp.ne.s32.totalorder %s69, %s71
      %p75 = scmp.eq.s32.totalorder %s21, 0
      %p76 = por %p74, %p75
      %p77 = scmp.ne.s32.totalorder %s69, %s71
      %p78 = scmp.eq.s32.totalorder %s26, 1
      %p79 = por %p77, %p78
      %p80 = scmp.ne.s32.totalorder %s71, %s72
      %p81 = scmp.eq.s32.totalorder %s26, 0
      %p82 = por %p80, %p81
      %p83 = scmp.ne.s32.totalorder %s71, %s72
      %p84 = scmp.eq.s32.totalorder %s27, 1
      %p85 = por %p83, %p84
      %p87 = scmp.ne.s32.totalorder %s72, %s86
      %p88 = scmp.eq.s32.totalorder %s27, 0
      %p89 = por %p87, %p88
      %s91 = sadd.s32 %s90, 1
      %p94 = scmp.eq.s32.totalorder %s21, 1
      %p95 = scmp.ne.s32.totalorder %s90, %s92
      %p96 = scmp.eq.s32.totalorder %s21, 0
      %p97 = por %p95, %p96
      %p98 = scmp.ne.s32.totalorder %s90, %s92
      %p99 = scmp.eq.s32.totalorder %s26, 1
      %p100 = por %p98, %p99
      %p101 = scmp.ne.s32.totalorder %s92, %s93
      %p102 = scmp.eq.s32.totalorder %s26, 0
      %p103 = por %p101, %p102
      %p104 = scmp.ne.s32.totalorder %s92, %s93
      %p105 = scmp.eq.s32.totalorder %s27, 1
      %p106 = por %p104, %p105
      %p108 = scmp.ne.s32.totalorder %s93, %s107
      %p109 = scmp.eq.s32.totalorder %s27, 0
      %p110 = por %p108, %p109
      %s112 = sadd.s32 %s111, 1
      %p115 = scmp.eq.s32.totalorder %s21, 1
      %p116 = scmp.ne.s32.totalorder %s111, %s113
      %p117 = scmp.eq.s32.totalorder %s21, 0
      %p118 = por %p116, %p117
      %p119 = scmp.ne.s32.totalorder %s111, %s113
      %p120 = scmp.eq.s32.totalorder %s26, 1
      %p121 = por %p119, %p120
      %p122 = scmp.ne.s32.totalorder %s113, %s114
      %p123 = scmp.eq.s32.totalorder %s26, 0
      %p124 = por %p122, %p123
      %p125 = scmp.ne.s32.totalorder %s113, %s114
      %p126 = scmp.eq.s32.totalorder %s27, 1
      %p127 = por %p125, %p126
      %p129 = scmp.ne.s32.totalorder %s114, %s128
      %p130 = scmp.eq.s32.totalorder %s27, 0
      %p131 = por %p129, %p130
      %s133 = sadd.s32 %s132, 1
      %p136 = scmp.eq.s32.totalorder %s21, 1
      %p137 = scmp.ne.s32.totalorder %s132, %s134
      %p138 = scmp.eq.s32.totalorder %s21, 0
      %p139 = por %p137, %p138
      %p140 = scmp.ne.s32.totalorder %s132, %s134
      %p141 = scmp.eq.s32.totalorder %s26, 1
      %p142 = por %p140, %p141
      %p143 = scmp.ne.s32.totalorder %s134, %s135
      %p144 = scmp.eq.s32.totalorder %s26, 0
      %p145 = por %p143, %p144
      %p146 = scmp.ne.s32.totalorder %s134, %s135
      %p147 = scmp.eq.s32.totalorder %s27, 1
      %p148 = por %p146, %p147
      %p150 = scmp.ne.s32.totalorder %s135, %s149
      %p151 = scmp.eq.s32.totalorder %s27, 0
      %p152 = por %p150, %p151
      %s154 = sadd.s32 %s153, 1
      %p157 = scmp.eq.s32.totalorder %s21, 1
      %p158 = scmp.ne.s32.totalorder %s153, %s155
      %p159 = scmp.eq.s32.totalorder %s21, 0
      %p160 = por %p158, %p159
      %p161 = scmp.ne.s32.totalorder %s153, %s155
      %p162 = scmp.eq.s32.totalorder %s26, 1
      %p163 = por %p161, %p162
      %p164 = scmp.ne.s32.totalorder %s155, %s156
      %p165 = scmp.eq.s32.totalorder %s26, 0
      %p166 = por %p164, %p165
      %p167 = scmp.ne.s32.totalorder %s155, %s156
      %p168 = scmp.eq.s32.totalorder %s27, 1
      %p169 = por %p167, %p168
      %p171 = scmp.ne.s32.totalorder %s156, %s170
      %p172 = scmp.eq.s32.totalorder %s27, 0
      %p173 = por %p171, %p172
      %s175 = sadd.s32 %s174, 1
      %p178 = scmp.eq.s32.totalorder %s21, 1
      %p179 = scmp.ne.s32.totalorder %s174, %s176
      %p180 = scmp.eq.s32.totalorder %s21, 0
      %p181 = por %p179, %p180
      %p182 = scmp.ne.s32.totalorder %s174, %s176
      %p183 = scmp.eq.s32.totalorder %s26, 1
      %p184 = por %p182, %p183
      %p185 = scmp.ne.s32.totalorder %s176, %s177
      %p186 = scmp.eq.s32.totalorder %s26, 0
      %p187 = por %p185, %p186
      %p188 = scmp.ne.s32.totalorder %s176, %s177
      %p189 = scmp.eq.s32.totalorder %s27, 1
      %p190 = por %p188, %p189
      %p192 = scmp.ne.s32.totalorder %s177, %s191
      %p193 = scmp.eq.s32.totalorder %s27, 0
      %p194 = por %p192, %p193
      %s195 = ssub.s32 %s28, %s40
      %p196 = scmp.eq.s32.totalorder %s195, 0
      %s198 = sadd.s32 %s197, 1
      %s199 = scalar_select %p196, %s197, %s198
      %p202 = pneg %p196
      %p203 = scmp.eq.s32.totalorder %s21, 1
      %p204 = por %p202, %p203
      %p205 = scmp.ne.s32.totalorder %s197, %s200
      %p206 = scmp.eq.s32.totalorder %s21, 0
      %p207 = por %p205, %p206
      %p208 = scmp.ne.s32.totalorder %s197, %s200
      %p209 = scmp.eq.s32.totalorder %s26, 1
      %p210 = por %p208, %p209
      %p211 = scmp.ne.s32.totalorder %s200, %s201
      %p212 = scmp.eq.s32.totalorder %s26, 0
      %p213 = por %p211, %p212
      %p214 = scmp.ne.s32.totalorder %s200, %s201
      %p215 = scmp.eq.s32.totalorder %s27, 1
      %p216 = por %p214, %p215
      %p218 = scmp.ne.s32.totalorder %s201, %s217
      %p219 = scmp.eq.s32.totalorder %s27, 0
      %p220 = por %p218, %p219
      %p221 = scmp.le.s32.totalorder 1, %s21
      %p222 = scmp.lt.s32.totalorder %s21, 3
      %p223 = pnand %p221, %p222
      %p224 = pneg %p223
      // Predicated region
      $region9: #{tpu_custom_call.1} parent=5 // pred_check
        _
      $region10: #{tpu_custom_call.1} parent=5 // pred_check_branch
        %226 = sbr.rel (%p223) target = $region12
      $region11: #{tpu_custom_call.1} parent=5 // pred_region
        %s227 = ssub.s32 %s21, 1
        // Predicated region
        $region13: #{tpu_custom_call.1} parent=11 // pred_check
          %p228 = pneg %p82
        $region14: #{tpu_custom_call.1} parent=11 // pred_check_branch
          %230 = sbr.rel (%p228) target = $region16
        $region15: #{tpu_custom_call.1} parent=11 // pred_region
          %s232 = ssub.s32 1024, 1024
          %233 = vsyncadd [#allocation7], %s232
          %s234 = sshll.u32 [#allocation6], 4
          %s235 = int_to_ptr.vmem [resolvable:$true] %s234
          %240 = dma.hbm_to_vmem [thread:$0]  %s1, 1024, %s235, [#allocation7], 64, 64, 4
        $region16: #{tpu_custom_call.1} parent=11 // pred_fallthru
          _
        // Predicated region
        $region17: #{tpu_custom_call.1} parent=11 // pred_check
          %p241 = pneg %p103
        $region18: #{tpu_custom_call.1} parent=11 // pred_check_branch
          %243 = sbr.rel (%p241) target = $region20
        $region19: #{tpu_custom_call.1} parent=11 // pred_region
          _
        $region20: #{tpu_custom_call.1} parent=11 // pred_fallthru
          _
        // Predicated region
        $region21: #{tpu_custom_call.1} parent=11 // pred_check
          %p244 = pneg %p124
        $region22: #{tpu_custom_call.1} parent=11 // pred_check_branch
          %246 = sbr.rel (%p244) target = $region24
        $region23: #{tpu_custom_call.1} parent=11 // pred_region
          %s248 = ssub.s32 1024, 1024
          %249 = vsyncadd [#allocation7], %s248
          %s250 = sshll.u32 [#allocation8], 4
          %s251 = int_to_ptr.vmem [resolvable:$true] %s250
          %256 = dma.hbm_to_vmem [thread:$0]  %s3, 1024, %s251, [#allocation7], 64, 64, 4
        $region24: #{tpu_custom_call.1} parent=11 // pred_fallthru
          _
        // Predicated region
        $region25: #{tpu_custom_call.1} parent=11 // pred_check
          %p257 = pneg %p145
        $region26: #{tpu_custom_call.1} parent=11 // pred_check_branch
          %259 = sbr.rel (%p257) target = $region28
        $region27: #{tpu_custom_call.1} parent=11 // pred_region
          _
        $region28: #{tpu_custom_call.1} parent=11 // pred_fallthru
          _
        // Predicated region
        $region29: #{tpu_custom_call.1} parent=11 // pred_check
          %p260 = pneg %p166
        $region30: #{tpu_custom_call.1} parent=11 // pred_check_branch
          %262 = sbr.rel (%p260) target = $region32
        $region31: #{tpu_custom_call.1} parent=11 // pred_region
          %s264 = ssub.s32 1024, 1024
          %265 = vsyncadd [#allocation10], %s264
          %s266 = sshll.u32 [#allocation9], 4
          %s267 = int_to_ptr.vmem [resolvable:$true] %s266
          %272 = dma.hbm_to_vmem [thread:$0]  %s5, 1024, %s267, [#allocation10], 64, 64, 4
        $region32: #{tpu_custom_call.1} parent=11 // pred_fallthru
          _
        // Predicated region
        $region33: #{tpu_custom_call.1} parent=11 // pred_check
          %p273 = pneg %p187
        $region34: #{tpu_custom_call.1} parent=11 // pred_check_branch
          %275 = sbr.rel (%p273) target = $region36
        $region35: #{tpu_custom_call.1} parent=11 // pred_region
          _
        $region36: #{tpu_custom_call.1} parent=11 // pred_fallthru
          _
      $region12: #{tpu_custom_call.1} parent=5 // pred_fallthru
        _
      %p276 = scmp.lt.s32.totalorder %s21, 2
      // Predicated region
      $region37: #{tpu_custom_call.1} parent=5 // pred_check
        %p277 = pneg %p276
      $region38: #{tpu_custom_call.1} parent=5 // pred_check_branch
        %279 = sbr.rel (%p277) target = $region40
      $region39: #{tpu_custom_call.1} parent=5 // pred_region
        // Predicated region
        $region41: #{tpu_custom_call.1} parent=39 // pred_check
          %p280 = pneg %p55
        $region42: #{tpu_custom_call.1} parent=39 // pred_check_branch
          %282 = sbr.rel (%p280) target = $region44
        $region43: #{tpu_custom_call.1} parent=39 // pred_region
          %s283 = sand.u32 %s45, 1
          %s284 = scalar_lea.sflag [#allocation4], %s283
          %s285 = sand.u32 %s45, 1
          %s286 = smul.addr %s285, 8
          %s287 = scalar_lea.vmem [#allocation3], %s286
          %s288 = smul.u32 2, %s29
          %s290 = ssub.s32 128, 128
          %291 = vsyncadd %s284, %s290
          %s292 = smul.addr %s28, 2
          %s293 = sadd.s32 %s288, %s292
          %s294 = smul.addr %s293, 64
          %s295 = scalar_lea.hbm %s0, %s294
          %s296 = sshll.u32 %s287, 4
          %s297 = int_to_ptr.vmem [resolvable:$true] %s296
          %302 = dma.hbm_to_vmem [thread:$0]  %s295, 128, %s297, %s284, 64, 64, 4
        $region44: #{tpu_custom_call.1} parent=39 // pred_fallthru
          _
      $region40: #{tpu_custom_call.1} parent=5 // pred_fallthru
        _
      %p303 = scmp.le.s32.totalorder 1, %s21
      %p304 = scmp.lt.s32.totalorder %s21, 3
      %p305 = pnand %p303, %p304
      %p306 = pneg %p305
      // Predicated region
      $region45: #{tpu_custom_call.1} parent=5 // pred_check
        _
      $region46: #{tpu_custom_call.1} parent=5 // pred_check_branch
        %308 = sbr.rel (%p305) target = $region48
      $region47: #{tpu_custom_call.1} parent=5 // pred_region
        %s309 = ssub.s32 %s21, 1
        %s310 = sand.u32 %s48, 1
        %s311 = scalar_lea.sflag [#allocation4], %s310
        %s312 = sand.u32 %s48, 1
        %s313 = smul.addr %s312, 8
        %s314 = scalar_lea.vmem [#allocation3], %s313
        // Predicated region
        $region49: #{tpu_custom_call.1} parent=47 // pred_check
          %p315 = pneg %p61
        $region50: #{tpu_custom_call.1} parent=47 // pred_check_branch
          %317 = sbr.rel (%p315) target = $region52
        $region51: #{tpu_custom_call.1} parent=47 // pred_region
          %318 = dma.done %s311, 128
        $region52: #{tpu_custom_call.1} parent=47 // pred_fallthru
          _
        // Predicated region
        $region53: #{tpu_custom_call.1} parent=47 // pred_check
          %p319 = pneg %p82
        $region54: #{tpu_custom_call.1} parent=47 // pred_check_branch
          %321 = sbr.rel (%p319) target = $region56
        $region55: #{tpu_custom_call.1} parent=47 // pred_region
          %322 = dma.done [#allocation7], 1024
        $region56: #{tpu_custom_call.1} parent=47 // pred_fallthru
          _
        // Predicated region
        $region57: #{tpu_custom_call.1} parent=47 // pred_check
          %p323 = pneg %p124
        $region58: #{tpu_custom_call.1} parent=47 // pred_check_branch
          %325 = sbr.rel (%p323) target = $region60
        $region59: #{tpu_custom_call.1} parent=47 // pred_region
          %326 = dma.done [#allocation7], 1024
        $region60: #{tpu_custom_call.1} parent=47 // pred_fallthru
          _
        // Predicated region
        $region61: #{tpu_custom_call.1} parent=47 // pred_check
          %p327 = pneg %p166
        $region62: #{tpu_custom_call.1} parent=47 // pred_check_branch
          %329 = sbr.rel (%p327) target = $region64
        $region63: #{tpu_custom_call.1} parent=47 // pred_region
          %330 = dma.done [#allocation10], 1024
        $region64: #{tpu_custom_call.1} parent=47 // pred_fallthru
          _
        %s331 = sand.u32 %s48, 1
        %s332 = scalar_lea.sflag [#allocation4], %s331
        %s333 = sand.u32 %s48, 1
        %s334 = smul.addr %s333, 8
        %s335 = scalar_lea.vmem [#allocation3], %s334
        %p336 = pneg %p61
        %p337 = pneg %p58
        %p338 = pneg %p82
        %p339 = pneg %p79
        %p340 = pneg %p103
        %p341 = pneg %p100
        %p342 = pneg %p124
        %p343 = pneg %p121
        %p344 = pneg %p145
        %p345 = pneg %p142
        %p346 = pneg %p166
        %p347 = pneg %p163
        %p348 = pneg %p187
        %p349 = pneg %p184
        %p350 = pneg %p213
        %p351 = pneg %p210
        %s352 = sand.u32 %s200, 1
        %s353 = scalar_lea.sflag [#allocation5], %s352
        %s354 = sand.u32 %s200, 1
        %s355 = scalar_lea.vmem [#allocation11], %s354
        %s356 = smul.u32 2, %s31
        %p358 = scmp.eq.s32.totalorder %s31, 0
        // Predicated region
        $region65: #{tpu_custom_call.1} parent=47 // pred_check
          %p359 = pneg %p358
        $region66: #{tpu_custom_call.1} parent=47 // pred_check_branch
          %361 = sbr.rel (%p359) target = $region68
        $region67: #{tpu_custom_call.1} parent=47 // pred_region
          %362 = vst [vmem:[#allocation2] sm:$0x1] 0.0
        $region68: #{tpu_custom_call.1} parent=47 // pred_fallthru
          _
        %v363 = vld [vmem:[%s314] sm:$0xf]
        %v364 = vld [vmem:[%s314 + $0x4] sm:$0xf]
        %v365 = vld [vmem:[#allocation6] sm:$0xf]
        %v366 = vld [vmem:[#allocation6 + $0x4] sm:$0xf]
        %v367 = vld [vmem:[#allocation6 + $0x8] sm:$0xf]
        %v368 = vld [vmem:[#allocation6 + $0xc] sm:$0xf]
        %v369 = vld [vmem:[#allocation6 + $0x10] sm:$0xf]
        %v370 = vld [vmem:[#allocation6 + $0x14] sm:$0xf]
        %v371 = vld [vmem:[#allocation6 + $0x18] sm:$0xf]
        %v372 = vld [vmem:[#allocation6 + $0x1c] sm:$0xf]
        %v373 = vld [vmem:[#allocation6 + $0x20] sm:$0xf]
        %v374 = vld [vmem:[#allocation6 + $0x24] sm:$0xf]
        %v375 = vld [vmem:[#allocation6 + $0x28] sm:$0xf]
        %v376 = vld [vmem:[#allocation6 + $0x2c] sm:$0xf]
        %v377 = vld [vmem:[#allocation6 + $0x30] sm:$0xf]
        %v378 = vld [vmem:[#allocation6 + $0x34] sm:$0xf]
        %v379 = vld [vmem:[#allocation6 + $0x38] sm:$0xf]
        %v380 = vld [vmem:[#allocation6 + $0x3c] sm:$0xf]
        %v383 = vunpack.c.l.b16 %v363
        %v384 = vunpack.c.l.b16 %v364
        %v385 = vpack.c.b16 %v384, %v383
        %v403 = vunpack.c.l.b16 %v365
        %v404 = vunpack.c.l.b16 %v366
        %v405 = vunpack.c.l.b16 %v367
        %v406 = vunpack.c.l.b16 %v368
        %v407 = vunpack.c.l.b16 %v369
        %v408 = vunpack.c.l.b16 %v370
        %v409 = vunpack.c.l.b16 %v371
        %v410 = vunpack.c.l.b16 %v372
        %v411 = vunpack.c.l.b16 %v373
        %v412 = vunpack.c.l.b16 %v374
        %v413 = vunpack.c.l.b16 %v375
        %v414 = vunpack.c.l.b16 %v376
        %v415 = vunpack.c.l.b16 %v377
        %v416 = vunpack.c.l.b16 %v378
        %v417 = vunpack.c.l.b16 %v379
        %v418 = vunpack.c.l.b16 %v380
        %v419 = vpack.c.b16 %v404, %v403
        %v420 = vpack.c.b16 %v406, %v405
        %v421 = vpack.c.b16 %v408, %v407
        %v422 = vpack.c.b16 %v410, %v409
        %v423 = vpack.c.b16 %v412, %v411
        %v424 = vpack.c.b16 %v414, %v413
        %v425 = vpack.c.b16 %v416, %v415
        %v426 = vpack.c.b16 %v418, %v417
        %435 = vmatprep.subr.bf16.mxu0 0
        %436 = vmatpush1.bf16.msra.mxu0 %v419
        %437 = vmatprep.subr.bf16.mxu0 0
        %438 = vmatpush1.bf16.msra.mxu0 %v420
        %439 = vmatprep.subr.bf16.mxu0 0
        %440 = vmatpush1.bf16.msra.mxu0 %v421
        %441 = vmatprep.subr.bf16.mxu0 0
        %442 = vmatpush1.bf16.msra.mxu0 %v422
        %443 = vmatprep.subr.bf16.mxu0 0
        %444 = vmatpush1.bf16.msra.mxu0 %v423
        %445 = vmatprep.subr.bf16.mxu0 0
        %446 = vmatpush1.bf16.msra.mxu0 %v424
        %447 = vmatprep.subr.bf16.mxu0 0
        %448 = vmatpush1.bf16.msra.mxu0 %v425
        %449 = vmatprep.subr.bf16.mxu0 0
        %450 = vmatpush1.bf16.msra.mxu0 %v426
        %451 = vmatprep.subr.bf16.mxu0 0
        %452 = vmatpush1.bf16.msra.mxu0 0
        %453 = vmatprep.subr.bf16.mxu0 0
        %454 = vmatpush1.bf16.msra.mxu0 0
        %455 = vmatprep.subr.bf16.mxu0 0
        %456 = vmatpush1.bf16.msra.mxu0 0
        %457 = vmatprep.subr.bf16.mxu0 0
        %458 = vmatpush1.bf16.msra.mxu0 0
        %459 = vmatprep.subr.bf16.mxu0 0
        %460 = vmatpush1.bf16.msra.mxu0 0
        %461 = vmatprep.subr.bf16.mxu0 0
        %462 = vmatpush1.bf16.msra.mxu0 0
        %463 = vmatprep.subr.bf16.mxu0 0
        %464 = vmatpush1.bf16.msra.mxu0 0
        %465 = vmatprep.subr.bf16.mxu0 0
        %466 = vmatpush1.bf16.msra.mxu0 0
        %467 = vmatprep.mubr.bf16.mxu0 0
        %468 = vmatmul.mubr.bf16.gmra.mrb[0].mxu0 %v385
        %v469 = vpop.f32.mrb[0].mxu0
        %v470 = vadd.f32 0.0, %v469
        %v471 = vpop.f32.mrb[0].mxu0
        %v472 = vpop.f32.mrb[0].mxu0
        %v473 = vadd.f32 0.0, %v472
        %v474 = vpop.f32.mrb[0].mxu0
        %475 = vdwg.mxu0
        %v476 = vld [vmem:[#allocation2] sm:$0x1]
        %v477 = vadd.f32 %v470, %v473
        %v478 = vrot.slane %v477, 4
        %v479 = vadd.f32 %v477, %v478
        %v480 = vrot.slane %v479, 2
        %v481 = vadd.f32 %v479, %v480
        %v482 = vrot.slane %v481, 1
        %v483 = vadd.f32 %v481, %v482
        %v484 = vadd.f32 %v476, %v483
        %485 = vst [vmem:[#allocation2] sm:$0x1] %v484
        // Predicated region
        $region69: #{tpu_custom_call.1} parent=47 // pred_check
          %p486 = pneg %p358
        $region70: #{tpu_custom_call.1} parent=47 // pred_check_branch
          %488 = sbr.rel (%p486) target = $region72
        $region71: #{tpu_custom_call.1} parent=47 // pred_region
          %v489 = vld [vmem:[#allocation2] sm:$0x1]
          %v490 = vmul.f32 %v489, 0.0625
          %v491 = vld [vmem:[%s2] sm:$0x1]
          %v492 = vadd.f32 %v490, %v491
          %v493 = vpack.c.bf16 %v492, %v492
          %v494 = vld [vmem:[#allocation8] sm:$0xf]
          %v495 = vld [vmem:[#allocation8 + $0x4] sm:$0xf]
          %v496 = vld [vmem:[#allocation8 + $0x8] sm:$0xf]
          %v497 = vld [vmem:[#allocation8 + $0xc] sm:$0xf]
          %v498 = vld [vmem:[#allocation8 + $0x10] sm:$0xf]
          %v499 = vld [vmem:[#allocation8 + $0x14] sm:$0xf]
          %v500 = vld [vmem:[#allocation8 + $0x18] sm:$0xf]
          %v501 = vld [vmem:[#allocation8 + $0x1c] sm:$0xf]
          %v502 = vld [vmem:[#allocation8 + $0x20] sm:$0xf]
          %v503 = vld [vmem:[#allocation8 + $0x24] sm:$0xf]
          %v504 = vld [vmem:[#allocation8 + $0x28] sm:$0xf]
          %v505 = vld [vmem:[#allocation8 + $0x2c] sm:$0xf]
          %v506 = vld [vmem:[#allocation8 + $0x30] sm:$0xf]
          %v507 = vld [vmem:[#allocation8 + $0x34] sm:$0xf]
          %v508 = vld [vmem:[#allocation8 + $0x38] sm:$0xf]
          %v509 = vld [vmem:[#allocation8 + $0x3c] sm:$0xf]
          %v510 = vld [vmem:[%s4] sm:$0x1]
          %v527 = vunpack.c.l.b16 %v494
          %v528 = vunpack.c.l.b16 %v495
          %v529 = vunpack.c.l.b16 %v496
          %v530 = vunpack.c.l.b16 %v497
          %v531 = vunpack.c.l.b16 %v498
          %v532 = vunpack.c.l.b16 %v499
          %v533 = vunpack.c.l.b16 %v500
          %v534 = vunpack.c.l.b16 %v501
          %v535 = vunpack.c.l.b16 %v502
          %v536 = vunpack.c.l.b16 %v503
          %v537 = vunpack.c.l.b16 %v504
          %v538 = vunpack.c.l.b16 %v505
          %v539 = vunpack.c.l.b16 %v506
          %v540 = vunpack.c.l.b16 %v507
          %v541 = vunpack.c.l.b16 %v508
          %v542 = vunpack.c.l.b16 %v509
          %v543 = vpack.c.b16 %v528, %v527
          %v544 = vpack.c.b16 %v530, %v529
          %v545 = vpack.c.b16 %v532, %v531
          %v546 = vpack.c.b16 %v534, %v533
          %v547 = vpack.c.b16 %v536, %v535
          %v548 = vpack.c.b16 %v538, %v537
          %v549 = vpack.c.b16 %v540, %v539
          %v550 = vpack.c.b16 %v542, %v541
          %559 = vmatprep.subr.bf16.mxu0 0
          %560 = vmatpush1.bf16.msra.mxu0 %v543
          %561 = vmatprep.subr.bf16.mxu0 0
          %562 = vmatpush1.bf16.msra.mxu0 %v544
          %563 = vmatprep.subr.bf16.mxu0 0
          %564 = vmatpush1.bf16.msra.mxu0 %v545
          %565 = vmatprep.subr.bf16.mxu0 0
          %566 = vmatpush1.bf16.msra.mxu0 %v546
          %567 = vmatprep.subr.bf16.mxu0 0
          %568 = vmatpush1.bf16.msra.mxu0 %v547
          %569 = vmatprep.subr.bf16.mxu0 0
          %570 = vmatpush1.bf16.msra.mxu0 %v548
          %571 = vmatprep.subr.bf16.mxu0 0
          %572 = vmatpush1.bf16.msra.mxu0 %v549
          %573 = vmatprep.subr.bf16.mxu0 0
          %574 = vmatpush1.bf16.msra.mxu0 %v550
          %575 = vmatprep.subr.bf16.mxu0 0
          %576 = vmatpush1.bf16.msra.mxu0 0
          %577 = vmatprep.subr.bf16.mxu0 0
          %578 = vmatpush1.bf16.msra.mxu0 0
          %579 = vmatprep.subr.bf16.mxu0 0
          %580 = vmatpush1.bf16.msra.mxu0 0
          %581 = vmatprep.subr.bf16.mxu0 0
          %582 = vmatpush1.bf16.msra.mxu0 0
          %583 = vmatprep.subr.bf16.mxu0 0
          %584 = vmatpush1.bf16.msra.mxu0 0
          %585 = vmatprep.subr.bf16.mxu0 0
          %586 = vmatpush1.bf16.msra.mxu0 0
          %587 = vmatprep.subr.bf16.mxu0 0
          %588 = vmatpush1.bf16.msra.mxu0 0
          %589 = vmatprep.subr.bf16.mxu0 0
          %590 = vmatpush1.bf16.msra.mxu0 0
          %591 = vmatprep.mubr.bf16.mxu0 0
          %592 = vmatmul.mubr.bf16.gmra.mrb[0].mxu0 %v493
          %v593 = vpop.f32.mrb[0].mxu0
          %v594 = vadd.f32 %v510, %v593
          %v595 = vpop.f32.mrb[0].mxu0
          %v596 = vpop.f32.mrb[0].mxu0
          %v597 = vpop.f32.mrb[0].mxu0
          %598 = vdwg.mxu0
          %v599 = vtanh.pop %v594
          %v600 = vpack.c.bf16 %v599, %v599
          %v601 = vld [vmem:[#allocation9] sm:$0xf]
          %v602 = vld [vmem:[#allocation9 + $0x4] sm:$0xf]
          %v603 = vld [vmem:[#allocation9 + $0x8] sm:$0xf]
          %v604 = vld [vmem:[#allocation9 + $0xc] sm:$0xf]
          %v605 = vld [vmem:[#allocation9 + $0x10] sm:$0xf]
          %v606 = vld [vmem:[#allocation9 + $0x14] sm:$0xf]
          %v607 = vld [vmem:[#allocation9 + $0x18] sm:$0xf]
          %v608 = vld [vmem:[#allocation9 + $0x1c] sm:$0xf]
          %v609 = vld [vmem:[#allocation9 + $0x20] sm:$0xf]
          %v610 = vld [vmem:[#allocation9 + $0x24] sm:$0xf]
          %v611 = vld [vmem:[#allocation9 + $0x28] sm:$0xf]
          %v612 = vld [vmem:[#allocation9 + $0x2c] sm:$0xf]
          %v613 = vld [vmem:[#allocation9 + $0x30] sm:$0xf]
          %v614 = vld [vmem:[#allocation9 + $0x34] sm:$0xf]
          %v615 = vld [vmem:[#allocation9 + $0x38] sm:$0xf]
          %v616 = vld [vmem:[#allocation9 + $0x3c] sm:$0xf]
          %v617 = vld [vmem:[%s6] sm:$0x1]
          %v634 = vunpack.c.l.b16 %v601
          %v635 = vunpack.c.l.b16 %v602
          %v636 = vunpack.c.l.b16 %v603
          %v637 = vunpack.c.l.b16 %v604
          %v638 = vunpack.c.l.b16 %v605
          %v639 = vunpack.c.l.b16 %v606
          %v640 = vunpack.c.l.b16 %v607
          %v641 = vunpack.c.l.b16 %v608
          %v642 = vunpack.c.l.b16 %v609
          %v643 = vunpack.c.l.b16 %v610
          %v644 = vunpack.c.l.b16 %v611
          %v645 = vunpack.c.l.b16 %v612
          %v646 = vunpack.c.l.b16 %v613
          %v647 = vunpack.c.l.b16 %v614
          %v648 = vunpack.c.l.b16 %v615
          %v649 = vunpack.c.l.b16 %v616
          %v650 = vpack.c.b16 %v635, %v634
          %v651 = vpack.c.b16 %v637, %v636
          %v652 = vpack.c.b16 %v639, %v638
          %v653 = vpack.c.b16 %v641, %v640
          %v654 = vpack.c.b16 %v643, %v642
          %v655 = vpack.c.b16 %v645, %v644
          %v656 = vpack.c.b16 %v647, %v646
          %v657 = vpack.c.b16 %v649, %v648
          %666 = vmatprep.subr.bf16.mxu0 0
          %667 = vmatpush1.bf16.msra.mxu0 %v650
          %668 = vmatprep.subr.bf16.mxu0 0
          %669 = vmatpush1.bf16.msra.mxu0 %v651
          %670 = vmatprep.subr.bf16.mxu0 0
          %671 = vmatpush1.bf16.msra.mxu0 %v652
          %672 = vmatprep.subr.bf16.mxu0 0
          %673 = vmatpush1.bf16.msra.mxu0 %v653
          %674 = vmatprep.subr.bf16.mxu0 0
          %675 = vmatpush1.bf16.msra.mxu0 %v654
          %676 = vmatprep.subr.bf16.mxu0 0
          %677 = vmatpush1.bf16.msra.mxu0 %v655
          %678 = vmatprep.subr.bf16.mxu0 0
          %679 = vmatpush1.bf16.msra.mxu0 %v656
          %680 = vmatprep.subr.bf16.mxu0 0
          %681 = vmatpush1.bf16.msra.mxu0 %v657
          %682 = vmatprep.subr.bf16.mxu0 0
          %683 = vmatpush1.bf16.msra.mxu0 0
          %684 = vmatprep.subr.bf16.mxu0 0
          %685 = vmatpush1.bf16.msra.mxu0 0
          %686 = vmatprep.subr.bf16.mxu0 0
          %687 = vmatpush1.bf16.msra.mxu0 0
          %688 = vmatprep.subr.bf16.mxu0 0
          %689 = vmatpush1.bf16.msra.mxu0 0
          %690 = vmatprep.subr.bf16.mxu0 0
          %691 = vmatpush1.bf16.msra.mxu0 0
          %692 = vmatprep.subr.bf16.mxu0 0
          %693 = vmatpush1.bf16.msra.mxu0 0
          %694 = vmatprep.subr.bf16.mxu0 0
          %695 = vmatpush1.bf16.msra.mxu0 0
          %696 = vmatprep.subr.bf16.mxu0 0
          %697 = vmatpush1.bf16.msra.mxu0 0
          %698 = vmatprep.mubr.bf16.mxu0 0
          %699 = vmatmul.mubr.bf16.gmra.mrb[0].mxu0 %v600
          %v700 = vpop.f32.mrb[0].mxu0
          %v701 = vadd.f32 %v617, %v700
          %v702 = vpop.f32.mrb[0].mxu0
          %v703 = vpop.f32.mrb[0].mxu0
          %v704 = vpop.f32.mrb[0].mxu0
          %705 = vdwg.mxu0
          %706 = vst [vmem:[%s355] sm:$0x1] %v701
        $region72: #{tpu_custom_call.1} parent=47 // pred_fallthru
          _
        %s707 = sand.u32 %s200, 1
        %s708 = scalar_lea.sflag [#allocation5], %s707
        %s709 = sand.u32 %s200, 1
        %s710 = scalar_lea.vmem [#allocation11], %s709
        // Predicated region
        $region73: #{tpu_custom_call.1} parent=47 // pred_check
          %p711 = pneg %p210
        $region74: #{tpu_custom_call.1} parent=47 // pred_check_branch
          %713 = sbr.rel (%p711) target = $region76
        $region75: #{tpu_custom_call.1} parent=47 // pred_region
          %s715 = ssub.s32 16, 16
          %716 = vsyncadd %s708, %s715
          %s717 = smul.addr %s30, 16
          %s718 = scalar_lea.hbm %s7, %s717
          %s720 = sshll.u32 %s710, 4
          %s721 = int_to_ptr.vmem [resolvable:$true] %s720
          %723 = dma.vmem_to_hbm [thread:$0]  %s721, 16, %s718, %s708
        $region76: #{tpu_custom_call.1} parent=47 // pred_fallthru
          _
      $region48: #{tpu_custom_call.1} parent=5 // pred_fallthru
        _
      %p724 = scmp.le.s32.totalorder 2, %s21
      // Predicated region
      $region77: #{tpu_custom_call.1} parent=5 // pred_check
        %p725 = pneg %p724
      $region78: #{tpu_custom_call.1} parent=5 // pred_check_branch
        %727 = sbr.rel (%p725) target = $region80
      $region79: #{tpu_custom_call.1} parent=5 // pred_region
        %s728 = ssub.s32 %s21, 2
        // Predicated region
        $region81: #{tpu_custom_call.1} parent=79 // pred_check
          %p729 = pneg %p216
        $region82: #{tpu_custom_call.1} parent=79 // pred_check_branch
          %731 = sbr.rel (%p729) target = $region84
        $region83: #{tpu_custom_call.1} parent=79 // pred_region
          %s732 = sand.u32 %s201, 1
          %s733 = scalar_lea.sflag [#allocation5], %s732
          %s734 = sand.u32 %s201, 1
          %s735 = scalar_lea.vmem [#allocation11], %s734
          %736 = dma.done %s733, 16
        $region84: #{tpu_custom_call.1} parent=79 // pred_fallthru
          _
      $region80: #{tpu_custom_call.1} parent=5 // pred_fallthru
        _
    $region6: #{tpu_custom_call.1} parent=1 // loop_footer
      %s25 = sadd.s32 1, %s21
    $region7: #{tpu_custom_call.1} parent=1 // loop_footer_branch
      %20 = sbr.rel target = $region3
    $region8: #{tpu_custom_call.1} parent=1 // loop_exit
      _
    %737 = vsyncpa [#allocation4], 1
    %s738 = scalar_lea.sflag [#allocation4], 1
    %739 = vsyncpa %s738, 1
    %740 = vsyncpa [#allocation7], 1
    %741 = vsyncpa [#allocation10], 1
    %742 = vsyncpa [#allocation5], 1
    %s743 = scalar_lea.sflag [#allocation5], 1
    %744 = vsyncpa %s743, 1

</llo_original>
